<compile_context>
chip_gen: v5e
topology: v5e:2x2
jax: 0.10.0
libtpu: 0.0.40
codegen_flags: <defaults>
</compile_context>

<pallas_src>
import functools

import jax
import jax.numpy as jnp
from jax.experimental import pallas as pl
from jax.experimental.pallas import tpu as pltpu

BN_EPS = 1e-5


def _conv1x1(w, b, x):
    """1x1 conv on a channels-major pixel tile.

    w: (C_out, C_in), b: (C_out, 1), x: (C_in, T)  ->  (C_out, T) float32.
    """
    c_out, c_in = w.shape
    if c_in <= 32:
        # Tiny contraction: unrolled VPU broadcast FMAs, skip the MXU entirely.
        acc = w[:, 0:1] * x[0:1, :]
        for ci in range(1, c_in):
            acc = acc + w[:, ci:ci + 1] * x[ci:ci + 1, :]
        return acc + b
    # Larger channel counts: route through the MXU.
    return jnp.dot(w, x, preferred_element_type=jnp.float32) + b


def _stats_kernel(x_ref, w_ref, b_ref, g_ref, beta_ref,
                  scale_ref, shift_ref, sum_ref, sq_ref, *, count):
    """Pass 1: accumulate per-channel sum / sum-of-squares of y = conv(x)."""
    i = pl.program_id(0)
    j = pl.program_id(1)

    @pl.when(jnp.logical_and(i == 0, j == 0))
    def _init():
        sum_ref[...] = jnp.zeros_like(sum_ref)
        sq_ref[...] = jnp.zeros_like(sq_ref)

    y = _conv1x1(w_ref[...], b_ref[...], x_ref[...])        # (C, T) f32
    sum_ref[...] += jnp.sum(y, axis=1, keepdims=True)        # per-channel sum
    sq_ref[...] += jnp.sum(y * y, axis=1, keepdims=True)     # per-channel sum sq

    is_last = jnp.logical_and(i == pl.num_programs(0) - 1,
                              j == pl.num_programs(1) - 1)

    @pl.when(is_last)
    def _finalize():
        inv_n = jnp.float32(1.0 / count)
        mean = sum_ref[...] * inv_n
        # Biased variance (what training-mode BN normalizes with), computed as
        # E[y^2] - mean^2 with f32 accumulators; clamp guards tiny negative
        # values from cancellation.
        var = jnp.maximum(sq_ref[...] * inv_n - mean * mean, 0.0)
        inv_std = jax.lax.rsqrt(var + BN_EPS)
        scale = g_ref[...] * inv_std
        scale_ref[...] = scale
        shift_ref[...] = beta_ref[...] - mean * scale


def _normalize_kernel(x_ref, w_ref, b_ref, scale_ref, shift_ref, o_ref):
    """Pass 2: recompute conv and apply the folded BN affine, tile-parallel."""
    y = _conv1x1(w_ref[...], b_ref[...], x_ref[...])          # (C, T) f32
    o_ref[...] = (y * scale_ref[...] + shift_ref[...]).astype(o_ref.dtype)


def _pick_pixel_tile(hw, c, target_bytes=2 << 20):
    """Largest multiple-of-128 divisor of hw with c*t*4 bytes <= target_bytes.

    Small enough to fit comfortably in every generation's default scoped VMEM
    with double buffering (v5e 16 MiB / v6e 32 MiB / v7x 32-of-64 MiB), large
    enough to amortize the ~0.35us per-grid-step overhead.
    """
    if hw % 128 != 0:
        # Ragged pixel count: fall back to a single full-width (lane-dense) tile.
        return hw
    t_cap = max(128, (target_bytes // (4 * c)) // 128 * 128)
    best, t = 128, 128
    limit = min(hw, t_cap)
    while t <= limit:
        if hw % t == 0:
            best = t
        t += 128
    return best


def image_vnet_forward(x, conv_w, conv_b, bn_gamma, bn_beta):
    """x: (N, C, H, W) float32.  Returns (N, C, H*W), matching the PyTorch forward."""
    n, c, h, wdt = x.shape
    hw = h * wdt

    x3 = x.reshape(n, c, hw)                  # free reshape, no transpose
    w_mat = conv_w.reshape(c, c)              # (C_out, C_in)
    b_col = conv_b.reshape(c, 1)
    g_col = bn_gamma.reshape(c, 1)
    bt_col = bn_beta.reshape(c, 1)

    t = _pick_pixel_tile(hw, c)
    grid = (n, hw // t)
    count = float(n * hw)

    # Pixel tiles: (C, T) per grid step, pixels on the lane axis (lane-dense).
    x_spec = pl.BlockSpec((None, c, t), lambda i, j: (i, 0, j))
    # Grid-resident parameter blocks (constant index -> DMA'd once).
    w_spec = pl.BlockSpec((c, c), lambda i, j: (0, 0))
    col_spec = pl.BlockSpec((c, 1), lambda i, j: (0, 0))

    # Pass 1: per-channel batch statistics, folded into scale/shift.
    scale, shift = pl.pallas_call(
        functools.partial(_stats_kernel, count=count),
        out_shape=(jax.ShapeDtypeStruct((c, 1), jnp.float32),
                   jax.ShapeDtypeStruct((c, 1), jnp.float32)),
        grid=grid,
        in_specs=[x_spec, w_spec, col_spec, col_spec, col_spec],
        out_specs=(col_spec, col_spec),
        scratch_shapes=[pltpu.VMEM((c, 1), jnp.float32),
                        pltpu.VMEM((c, 1), jnp.float32)],
        compiler_params=pltpu.CompilerParams(
            dimension_semantics=("arbitrary", "arbitrary")),
    )(x3, w_mat, b_col, g_col, bt_col)

    # Pass 2: recompute the cheap conv and normalize, fully parallel over tiles.
    out = pl.pallas_call(
        _normalize_kernel,
        out_shape=jax.ShapeDtypeStruct((n, c, hw), jnp.float32),
        grid=grid,
        in_specs=[x_spec, w_spec, col_spec, col_spec, col_spec],
        out_specs=x_spec,
        compiler_params=pltpu.CompilerParams(
            dimension_semantics=("parallel", "parallel")),
    )(x3, w_mat, b_col, scale, shift)

    return out


def _reference_forward(x, conv_w, conv_b, bn_gamma, bn_beta):
    """Plain-JAX reference of the PyTorch forward (training-mode BN)."""
    n, c, h, wdt = x.shape
    y = jnp.einsum("nchw,oc->nohw", x, conv_w.reshape(c, c)) + conv_b[None, :, None, None]
    mean = jnp.mean(y, axis=(0, 2, 3), keepdims=True)
    var = jnp.mean((y - mean) ** 2, axis=(0, 2, 3), keepdims=True)
    y = (y - mean) / jnp.sqrt(var + BN_EPS)
    y = y * bn_gamma[None, :, None, None] + bn_beta[None, :, None, None]
    return y.reshape(n, c, h * wdt)


if __name__ == "__main__":
    key = jax.random.PRNGKey(0)
    kx, kw, kb = jax.random.split(key, 3)

    N, C, H, W = 2, 4, 16, 16
    x = jax.random.normal(kx, (N, C, H, W), dtype=jnp.float32)

    # Deterministic parameter init (Conv2d(C, C, kernel_size=1) + BatchNorm2d(C)).
    fan_in = C  # 1x1 kernel
    bound = 1.0 / jnp.sqrt(jnp.float32(fan_in))
    conv_w = jax.random.uniform(kw, (C, C, 1, 1), jnp.float32, -bound, bound)
    conv_b = jax.random.uniform(kb, (C,), jnp.float32, -bound, bound)
    bn_gamma = jnp.ones((C,), jnp.float32)   # PyTorch BatchNorm2d default weight
    bn_beta = jnp.zeros((C,), jnp.float32)   # PyTorch BatchNorm2d default bias

    out = image_vnet_forward(x, conv_w, conv_b, bn_gamma, bn_beta)
    out = jax.block_until_ready(out)

    ref = _reference_forward(x, conv_w, conv_b, bn_gamma, bn_beta)
    assert out.shape == (N, C, H * W), out.shape
    assert jnp.allclose(out, ref, atol=1e-4, rtol=1e-4), float(jnp.max(jnp.abs(out - ref)))

    print("KERNEL_OK")
</pallas_src>

<mosaic_0001>
module attributes {stable_mosaic.version = 11 : i64} {
  func.func @_stats_kernel(%arg0: i32, %arg1: i32, %arg2: memref<1x4x256xf32, #tpu.memory_space<vmem>>, %arg3: memref<4x4xf32, #tpu.memory_space<vmem>>, %arg4: memref<4x1xf32, #tpu.memory_space<vmem>>, %arg5: memref<4x1xf32, #tpu.memory_space<vmem>>, %arg6: memref<4x1xf32, #tpu.memory_space<vmem>>, %arg7: memref<4x1xf32, #tpu.memory_space<vmem>>, %arg8: memref<4x1xf32, #tpu.memory_space<vmem>>, %arg9: memref<4x1xf32, #tpu.memory_space<vmem>>, %arg10: memref<4x1xf32, #tpu.memory_space<vmem>>) attributes {dimension_semantics = [#tpu.dimension_semantics<arbitrary>, #tpu.dimension_semantics<arbitrary>], iteration_bounds = array<i64: 2, 1>, scalar_prefetch = 0 : i64, scratch_operands = 2 : i64, tpu.core_type = #tpu.core_type<tc>, window_params = [{transform_indices = @transform_0, window_bounds = array<i64: 1, 4, 256>}, {pipeline_mode = #tpu.pipeline_mode<synchronous>, transform_indices = @transform_1, window_bounds = array<i64: 4, 4>}, {pipeline_mode = #tpu.pipeline_mode<synchronous>, transform_indices = @transform_2, window_bounds = array<i64: 4, 1>}, {pipeline_mode = #tpu.pipeline_mode<synchronous>, transform_indices = @transform_3, window_bounds = array<i64: 4, 1>}, {pipeline_mode = #tpu.pipeline_mode<synchronous>, transform_indices = @transform_4, window_bounds = array<i64: 4, 1>}, {pipeline_mode = #tpu.pipeline_mode<synchronous>, transform_indices = @transform_5, window_bounds = array<i64: 4, 1>}, {pipeline_mode = #tpu.pipeline_mode<synchronous>, transform_indices = @transform_6, window_bounds = array<i64: 4, 1>}]} {
    %c0_i32 = arith.constant 0 : i32
    %0 = arith.cmpi eq, %arg0, %c0_i32 : i32
    %c0_i32_0 = arith.constant 0 : i32
    %1 = arith.cmpi eq, %arg1, %c0_i32_0 : i32
    %2 = arith.andi %0, %1 : i1
    %3 = arith.extui %2 : i1 to i32
    %c0_i32_1 = arith.constant 0 : i32
    %4 = arith.cmpi ne, %3, %c0_i32_1 : i32
    scf.if %4 {
      %cst_19 = arith.constant 0.000000e+00 : f32
      %50 = vector.broadcast %cst_19 : f32 to vector<4x1xf32>
      %c0_20 = arith.constant 0 : index
      %c0_21 = arith.constant 0 : index
      %51 = vector.load %arg9[%c0_20, %c0_21] : memref<4x1xf32, #tpu.memory_space<vmem>>, vector<4x1xf32>
      tpu.vector_store %arg9[%c0_20, %c0_21], %50 {strides = array<i32>} : memref<4x1xf32, #tpu.memory_space<vmem>>, vector<4x1xf32>,
      %cst_22 = arith.constant 0.000000e+00 : f32
      %52 = vector.broadcast %cst_22 : f32 to vector<4x1xf32>
      %c0_23 = arith.constant 0 : index
      %c0_24 = arith.constant 0 : index
      %53 = vector.load %arg10[%c0_23, %c0_24] : memref<4x1xf32, #tpu.memory_space<vmem>>, vector<4x1xf32>
      tpu.vector_store %arg10[%c0_23, %c0_24], %52 {strides = array<i32>} : memref<4x1xf32, #tpu.memory_space<vmem>>, vector<4x1xf32>,
    } else {
    }
    %c0 = arith.constant 0 : index
    %c0_2 = arith.constant 0 : index
    %5 = vector.load %arg3[%c0, %c0_2] : memref<4x4xf32, #tpu.memory_space<vmem>>, vector<4x4xf32>
    %c0_3 = arith.constant 0 : index
    %c0_4 = arith.constant 0 : index
    %6 = vector.load %arg4[%c0_3, %c0_4] : memref<4x1xf32, #tpu.memory_space<vmem>>, vector<4x1xf32>
    %c0_5 = arith.constant 0 : index
    %c0_6 = arith.constant 0 : index
    %c0_7 = arith.constant 0 : index
    %7 = vector.load %arg2[%c0_5, %c0_6, %c0_7] : memref<1x4x256xf32, #tpu.memory_space<vmem>>, vector<1x4x256xf32>
    %8 = vector.shape_cast %7 : vector<1x4x256xf32> to vector<4x256xf32>
    %9 = vector.extract_strided_slice %5 {offsets = [0, 0], sizes = [4, 1], strides = [1, 1]} : vector<4x4xf32> to vector<4x1xf32>
    %10 = vector.extract_strided_slice %8 {offsets = [0, 0], sizes = [1, 256], strides = [1, 1]} : vector<4x256xf32> to vector<1x256xf32>
    %11 = vector.broadcast %9 : vector<4x1xf32> to vector<4x256xf32>
    %12 = vector.broadcast %10 : vector<1x256xf32> to vector<4x256xf32>
    %13 = arith.mulf %11, %12 : vector<4x256xf32>
    %14 = vector.extract_strided_slice %5 {offsets = [0, 1], sizes = [4, 1], strides = [1, 1]} : vector<4x4xf32> to vector<4x1xf32>
    %15 = vector.extract_strided_slice %8 {offsets = [1, 0], sizes = [1, 256], strides = [1, 1]} : vector<4x256xf32> to vector<1x256xf32>
    %16 = vector.broadcast %14 : vector<4x1xf32> to vector<4x256xf32>
    %17 = vector.broadcast %15 : vector<1x256xf32> to vector<4x256xf32>
    %18 = arith.mulf %16, %17 : vector<4x256xf32>
    %19 = arith.addf %13, %18 : vector<4x256xf32>
    %20 = vector.extract_strided_slice %5 {offsets = [0, 2], sizes = [4, 1], strides = [1, 1]} : vector<4x4xf32> to vector<4x1xf32>
    %21 = vector.extract_strided_slice %8 {offsets = [2, 0], sizes = [1, 256], strides = [1, 1]} : vector<4x256xf32> to vector<1x256xf32>
    %22 = vector.broadcast %20 : vector<4x1xf32> to vector<4x256xf32>
    %23 = vector.broadcast %21 : vector<1x256xf32> to vector<4x256xf32>
    %24 = arith.mulf %22, %23 : vector<4x256xf32>
    %25 = arith.addf %19, %24 : vector<4x256xf32>
    %26 = vector.extract_strided_slice %5 {offsets = [0, 3], sizes = [4, 1], strides = [1, 1]} : vector<4x4xf32> to vector<4x1xf32>
    %27 = vector.extract_strided_slice %8 {offsets = [3, 0], sizes = [1, 256], strides = [1, 1]} : vector<4x256xf32> to vector<1x256xf32>
    %28 = vector.broadcast %26 : vector<4x1xf32> to vector<4x256xf32>
    %29 = vector.broadcast %27 : vector<1x256xf32> to vector<4x256xf32>
    %30 = arith.mulf %28, %29 : vector<4x256xf32>
    %31 = arith.addf %25, %30 : vector<4x256xf32>
    %32 = vector.broadcast %6 : vector<4x1xf32> to vector<4x256xf32>
    %33 = arith.addf %31, %32 : vector<4x256xf32>
    %c0_8 = arith.constant 0 : index
    %c0_9 = arith.constant 0 : index
    %34 = vector.load %arg9[%c0_8, %c0_9] : memref<4x1xf32, #tpu.memory_space<vmem>>, vector<4x1xf32>
    %cst = arith.constant dense<0.000000e+00> : vector<4xf32>
    %35 = vector.multi_reduction <add>, %33, %cst [1] : vector<4x256xf32> to vector<4xf32>
    %36 = vector.shape_cast %35 : vector<4xf32> to vector<4x1xf32>
    %37 = arith.addf %34, %36 : vector<4x1xf32>
    %c0_10 = arith.constant 0 : index
    %c0_11 = arith.constant 0 : index
    %38 = vector.load %arg9[%c0_10, %c0_11] : memref<4x1xf32, #tpu.memory_space<vmem>>, vector<4x1xf32>
    tpu.vector_store %arg9[%c0_10, %c0_11], %37 {strides = array<i32>} : memref<4x1xf32, #tpu.memory_space<vmem>>, vector<4x1xf32>,
    %c0_12 = arith.constant 0 : index
    %c0_13 = arith.constant 0 : index
    %39 = vector.load %arg10[%c0_12, %c0_13] : memref<4x1xf32, #tpu.memory_space<vmem>>, vector<4x1xf32>
    %40 = arith.mulf %33, %33 : vector<4x256xf32>
    %cst_14 = arith.constant dense<0.000000e+00> : vector<4xf32>
    %41 = vector.multi_reduction <add>, %40, %cst_14 [1] : vector<4x256xf32> to vector<4xf32>
    %42 = vector.shape_cast %41 : vector<4xf32> to vector<4x1xf32>
    %43 = arith.addf %39, %42 : vector<4x1xf32>
    %c0_15 = arith.constant 0 : index
    %c0_16 = arith.constant 0 : index
    %44 = vector.load %arg10[%c0_15, %c0_16] : memref<4x1xf32, #tpu.memory_space<vmem>>, vector<4x1xf32>
    tpu.vector_store %arg10[%c0_15, %c0_16], %43 {strides = array<i32>} : memref<4x1xf32, #tpu.memory_space<vmem>>, vector<4x1xf32>,
    %c1_i32 = arith.constant 1 : i32
    %45 = arith.cmpi eq, %arg0, %c1_i32 : i32
    %c0_i32_17 = arith.constant 0 : i32
    %46 = arith.cmpi eq, %arg1, %c0_i32_17 : i32
    %47 = arith.andi %45, %46 : i1
    %48 = arith.extui %47 : i1 to i32
    %c0_i32_18 = arith.constant 0 : i32
    %49 = arith.cmpi ne, %48, %c0_i32_18 : i32
    scf.if %49 {
      %c0_19 = arith.constant 0 : index
      %c0_20 = arith.constant 0 : index
      %50 = vector.load %arg9[%c0_19, %c0_20] : memref<4x1xf32, #tpu.memory_space<vmem>>, vector<4x1xf32>
      %cst_21 = arith.constant 0.001953125 : f32
      %51 = vector.broadcast %cst_21 : f32 to vector<4x1xf32>
      %52 = arith.mulf %50, %51 : vector<4x1xf32>
      %c0_22 = arith.constant 0 : index
      %c0_23 = arith.constant 0 : index
      %53 = vector.load %arg10[%c0_22, %c0_23] : memref<4x1xf32, #tpu.memory_space<vmem>>, vector<4x1xf32>
      %cst_24 = arith.constant 0.001953125 : f32
      %54 = vector.broadcast %cst_24 : f32 to vector<4x1xf32>
      %55 = arith.mulf %53, %54 : vector<4x1xf32>
      %56 = arith.mulf %52, %52 : vector<4x1xf32>
      %57 = arith.subf %55, %56 : vector<4x1xf32>
      %cst_25 = arith.constant 0.000000e+00 : f32
      %58 = vector.broadcast %cst_25 : f32 to vector<4x1xf32>
      %59 = arith.maximumf %57, %58 : vector<4x1xf32>
      %cst_26 = arith.constant 9.99999974E-6 : f32
      %60 = vector.broadcast %cst_26 : f32 to vector<4x1xf32>
      %61 = arith.addf %59, %60 : vector<4x1xf32>
      %62 = math.rsqrt %61 : vector<4x1xf32>
      %c0_27 = arith.constant 0 : index
      %c0_28 = arith.constant 0 : index
      %63 = vector.load %arg5[%c0_27, %c0_28] : memref<4x1xf32, #tpu.memory_space<vmem>>, vector<4x1xf32>
      %64 = arith.mulf %63, %62 : vector<4x1xf32>
      %c0_29 = arith.constant 0 : index
      %c0_30 = arith.constant 0 : index
      %65 = vector.load %arg7[%c0_29, %c0_30] : memref<4x1xf32, #tpu.memory_space<vmem>>, vector<4x1xf32>
      tpu.vector_store %arg7[%c0_29, %c0_30], %64 {strides = array<i32>} : memref<4x1xf32, #tpu.memory_space<vmem>>, vector<4x1xf32>,
      %c0_31 = arith.constant 0 : index
      %c0_32 = arith.constant 0 : index
      %66 = vector.load %arg6[%c0_31, %c0_32] : memref<4x1xf32, #tpu.memory_space<vmem>>, vector<4x1xf32>
      %67 = arith.mulf %52, %64 : vector<4x1xf32>
      %68 = arith.subf %66, %67 : vector<4x1xf32>
      %c0_33 = arith.constant 0 : index
      %c0_34 = arith.constant 0 : index
      %69 = vector.load %arg8[%c0_33, %c0_34] : memref<4x1xf32, #tpu.memory_space<vmem>>, vector<4x1xf32>
      tpu.vector_store %arg8[%c0_33, %c0_34], %68 {strides = array<i32>} : memref<4x1xf32, #tpu.memory_space<vmem>>, vector<4x1xf32>,
    } else {
    }
    return
  }
  func.func @transform_0(%arg0: i32, %arg1: i32) -> (i32, i32, i32) {
    %c0_i32 = arith.constant 0 : i32
    %c0_i32_0 = arith.constant 0 : i32
    return %arg0, %c0_i32, %arg1 : i32, i32, i32
  }
  func.func @transform_1(%arg0: i32, %arg1: i32) -> (i32, i32) {
    %c0_i32 = arith.constant 0 : i32
    %c0_i32_0 = arith.constant 0 : i32
    %c0_i32_1 = arith.constant 0 : i32
    return %c0_i32, %c0_i32_0 : i32, i32
  }
  func.func @transform_2(%arg0: i32, %arg1: i32) -> (i32, i32) {
    %c0_i32 = arith.constant 0 : i32
    %c0_i32_0 = arith.constant 0 : i32
    %c0_i32_1 = arith.constant 0 : i32
    return %c0_i32, %c0_i32_0 : i32, i32
  }
  func.func @transform_3(%arg0: i32, %arg1: i32) -> (i32, i32) {
    %c0_i32 = arith.constant 0 : i32
    %c0_i32_0 = arith.constant 0 : i32
    %c0_i32_1 = arith.constant 0 : i32
    return %c0_i32, %c0_i32_0 : i32, i32
  }
  func.func @transform_4(%arg0: i32, %arg1: i32) -> (i32, i32) {
    %c0_i32 = arith.constant 0 : i32
    %c0_i32_0 = arith.constant 0 : i32
    %c0_i32_1 = arith.constant 0 : i32
    return %c0_i32, %c0_i32_0 : i32, i32
  }
  func.func @transform_5(%arg0: i32, %arg1: i32) -> (i32, i32) {
    %c0_i32 = arith.constant 0 : i32
    %c0_i32_0 = arith.constant 0 : i32
    %c0_i32_1 = arith.constant 0 : i32
    return %c0_i32, %c0_i32_0 : i32, i32
  }
  func.func @transform_6(%arg0: i32, %arg1: i32) -> (i32, i32) {
    %c0_i32 = arith.constant 0 : i32
    %c0_i32_0 = arith.constant 0 : i32
    %c0_i32_1 = arith.constant 0 : i32
    return %c0_i32, %c0_i32_0 : i32, i32
  }
}

</mosaic_0001>

<llo_original>
// kernel: tpu_custom_call.1
$region0: #{tpu_custom_call.1}
  #allocation0 [shape = 'u32[]', space=smem, size = 0x4, offset = 0x4, fixed_abs, tag = 'smem constant byte address 0x4 - core index']
  #allocation1 [shape = 'u32[72,128]{1,0:T(1,128)}', space=vmem, size = 0x9000, scoped, tag = 'internal scratch']
  #allocation2 [shape = 'f32[4,1]{1,0:T(4,128)}', space=vmem, size = 0x800, scoped, tag = 'scratch operand']
  #allocation3 [shape = 'f32[4,1]{1,0:T(4,128)}', space=vmem, size = 0x800, scoped, tag = 'scratch operand']
  %s0 = inlined_call_operand.hbm [shape: f32[2,4,256], index: 0, kind: input, shape index: {}]
  %s1 = inlined_call_operand.vmem [shape: f32[4,4], index: 1, kind: input, shape index: {}]
  %s2 = inlined_call_operand.vmem [shape: f32[4,1], index: 2, kind: input, shape index: {}]
  %s3 = inlined_call_operand.vmem [shape: f32[4,1], index: 3, kind: input, shape index: {}]
  %s4 = inlined_call_operand.vmem [shape: f32[4,1], index: 4, kind: input, shape index: {}]
  %s5 = inlined_call_operand.vmem [shape: f32[4,1], index: 5, kind: output, shape index: {0}]
  %s6 = inlined_call_operand.vmem [shape: f32[4,1], index: 6, kind: output, shape index: {1}]
  %7 = xla_tuple %s5, %s6
  %s8 = sld [smem:[#allocation0]]
  $region73: #{tpu_custom_call.1} parent=0
    _
  %s10 = ssub.s32 1, %s8
  %s11 = scalar_select 0, %s10, %s8
  $region1: #{tpu_custom_call.1} parent=0
    #allocation4 [shape = 'u8[8192]{0}', space=vmem, size = 0x2000, scoped, tag = 'input window, operand 0']
    #allocation5 [shape = 's32[2]{0}', space=sflag, size = 0x8, scoped, tag = 'scoped memory for tpu_custom_call.1']
    %12 = vsyncpa [#allocation5], 0
    %s13 = scalar_lea.sflag [#allocation5], 1
    %14 = vsyncpa %s13, 0
    loop: start=0, step=1, limit=4
    $region2: #{tpu_custom_call.1} parent=1 // loop_pre_header
      _
    $region3: #{tpu_custom_call.1} parent=1 // loop_header
      %s16 = sphi 0, %s20
      %p17 = scmp.ge.s32.totalorder %s16, 4
      %s23 = sphi 0, %s35
      %s24 = sphi 0, %s31
      %s25 = sphi 0, %s23
      %s26 = sphi 0, %s24
      %s27 = sphi 0, %s25
      %s28 = sphi 0, %s26
      %s40 = sphi 0, %s42
      %s43 = sphi 0, %s40
      %s44 = sphi 0, %s43
      %s60 = sphi 0, %s44
      %s64 = sphi 0, %s64
      %s66 = sphi 0, %s64
      %s67 = sphi 0, %s66
      %s81 = sphi 0, %s67
      %s85 = sphi 0, %s85
      %s87 = sphi 0, %s85
      %s88 = sphi 0, %s87
      %s102 = sphi 0, %s88
      %s106 = sphi 0, %s106
      %s108 = sphi 0, %s106
      %s109 = sphi 0, %s108
      %s123 = sphi 0, %s109
      %s127 = sphi 0, %s127
      %s129 = sphi 0, %s127
      %s130 = sphi 0, %s129
      %s144 = sphi 0, %s130
      %s148 = sphi 0, %s148
      %s150 = sphi 0, %s148
      %s151 = sphi 0, %s150
      %s165 = sphi 0, %s151
      %s169 = sphi 0, %s169
      %s171 = sphi 0, %s169
      %s172 = sphi 0, %s171
      %s186 = sphi 0, %s172
    $region4: #{tpu_custom_call.1} parent=1 // loop_header_branch
      %19 = sbr.rel (%p17) target = $region8
    $region5: #{tpu_custom_call.1} parent=1 // loop_body
      %s21 = ssub.s32 %s16, 1
      %s22 = ssub.s32 %s16, 2
      %s29 = sadd.s32 1, %s24
      %p30 = scmp.ge.s32.totalorder %s29, 1
      %s31 = scalar_select %p30, 0, %s29
      %s32 = sadd.s32 1, %s23
      %s33 = scalar_select %p30, %s32, %s23
      %p34 = scmp.ge.s32.totalorder %s33, 2
      %s35 = scalar_select %p34, 0, %s33
      %s36 = ssub.s32 %s23, %s35
      %s37 = ssub.s32 %s24, %s31
      %s38 = sor.u32 %s36, %s37
      %p39 = scmp.eq.s32.totalorder %s38, 0
      %s41 = sadd.s32 %s40, 1
      %s42 = scalar_select %p39, %s40, %s41
      %p45 = pneg %p39
      %p46 = scmp.eq.s32.totalorder %s16, 1
      %p47 = por %p45, %p46
      %p48 = scmp.ne.s32.totalorder %s40, %s43
      %p49 = scmp.eq.s32.totalorder %s16, 0
      %p50 = por %p48, %p49
      %p51 = scmp.ne.s32.totalorder %s40, %s43
      %p52 = scmp.eq.s32.totalorder %s21, 1
      %p53 = por %p51, %p52
      %p54 = scmp.ne.s32.totalorder %s43, %s44
      %p55 = scmp.eq.s32.totalorder %s21, 0
      %p56 = por %p54, %p55
      %p57 = scmp.ne.s32.totalorder %s43, %s44
      %p58 = scmp.eq.s32.totalorder %s22, 1
      %p59 = por %p57, %p58
      %p61 = scmp.ne.s32.totalorder %s44, %s60
      %p62 = scmp.eq.s32.totalorder %s22, 0
      %p63 = por %p61, %p62
      %s65 = sadd.s32 %s64, 1
      %p68 = scmp.eq.s32.totalorder %s16, 1
      %p69 = scmp.ne.s32.totalorder %s64, %s66
      %p70 = scmp.eq.s32.totalorder %s16, 0
      %p71 = por %p69, %p70
      %p72 = scmp.ne.s32.totalorder %s64, %s66
      %p73 = scmp.eq.s32.totalorder %s21, 1
      %p74 = por %p72, %p73
      %p75 = scmp.ne.s32.totalorder %s66, %s67
      %p76 = scmp.eq.s32.totalorder %s21, 0
      %p77 = por %p75, %p76
      %p78 = scmp.ne.s32.totalorder %s66, %s67
      %p79 = scmp.eq.s32.totalorder %s22, 1
      %p80 = por %p78, %p79
      %p82 = scmp.ne.s32.totalorder %s67, %s81
      %p83 = scmp.eq.s32.totalorder %s22, 0
      %p84 = por %p82, %p83
      %s86 = sadd.s32 %s85, 1
      %p89 = scmp.eq.s32.totalorder %s16, 1
      %p90 = scmp.ne.s32.totalorder %s85, %s87
      %p91 = scmp.eq.s32.totalorder %s16, 0
      %p92 = por %p90, %p91
      %p93 = scmp.ne.s32.totalorder %s85, %s87
      %p94 = scmp.eq.s32.totalorder %s21, 1
      %p95 = por %p93, %p94
      %p96 = scmp.ne.s32.totalorder %s87, %s88
      %p97 = scmp.eq.s32.totalorder %s21, 0
      %p98 = por %p96, %p97
      %p99 = scmp.ne.s32.totalorder %s87, %s88
      %p100 = scmp.eq.s32.totalorder %s22, 1
      %p101 = por %p99, %p100
      %p103 = scmp.ne.s32.totalorder %s88, %s102
      %p104 = scmp.eq.s32.totalorder %s22, 0
      %p105 = por %p103, %p104
      %s107 = sadd.s32 %s106, 1
      %p110 = scmp.eq.s32.totalorder %s16, 1
      %p111 = scmp.ne.s32.totalorder %s106, %s108
      %p112 = scmp.eq.s32.totalorder %s16, 0
      %p113 = por %p111, %p112
      %p114 = scmp.ne.s32.totalorder %s106, %s108
      %p115 = scmp.eq.s32.totalorder %s21, 1
      %p116 = por %p114, %p115
      %p117 = scmp.ne.s32.totalorder %s108, %s109
      %p118 = scmp.eq.s32.totalorder %s21, 0
      %p119 = por %p117, %p118
      %p120 = scmp.ne.s32.totalorder %s108, %s109
      %p121 = scmp.eq.s32.totalorder %s22, 1
      %p122 = por %p120, %p121
      %p124 = scmp.ne.s32.totalorder %s109, %s123
      %p125 = scmp.eq.s32.totalorder %s22, 0
      %p126 = por %p124, %p125
      %s128 = sadd.s32 %s127, 1
      %p131 = scmp.eq.s32.totalorder %s16, 1
      %p132 = scmp.ne.s32.totalorder %s127, %s129
      %p133 = scmp.eq.s32.totalorder %s16, 0
      %p134 = por %p132, %p133
      %p135 = scmp.ne.s32.totalorder %s127, %s129
      %p136 = scmp.eq.s32.totalorder %s21, 1
      %p137 = por %p135, %p136
      %p138 = scmp.ne.s32.totalorder %s129, %s130
      %p139 = scmp.eq.s32.totalorder %s21, 0
      %p140 = por %p138, %p139
      %p141 = scmp.ne.s32.totalorder %s129, %s130
      %p142 = scmp.eq.s32.totalorder %s22, 1
      %p143 = por %p141, %p142
      %p145 = scmp.ne.s32.totalorder %s130, %s144
      %p146 = scmp.eq.s32.totalorder %s22, 0
      %p147 = por %p145, %p146
      %s149 = sadd.s32 %s148, 1
      %p152 = scmp.eq.s32.totalorder %s16, 1
      %p153 = scmp.ne.s32.totalorder %s148, %s150
      %p154 = scmp.eq.s32.totalorder %s16, 0
      %p155 = por %p153, %p154
      %p156 = scmp.ne.s32.totalorder %s148, %s150
      %p157 = scmp.eq.s32.totalorder %s21, 1
      %p158 = por %p156, %p157
      %p159 = scmp.ne.s32.totalorder %s150, %s151
      %p160 = scmp.eq.s32.totalorder %s21, 0
      %p161 = por %p159, %p160
      %p162 = scmp.ne.s32.totalorder %s150, %s151
      %p163 = scmp.eq.s32.totalorder %s22, 1
      %p164 = por %p162, %p163
      %p166 = scmp.ne.s32.totalorder %s151, %s165
      %p167 = scmp.eq.s32.totalorder %s22, 0
      %p168 = por %p166, %p167
      %s170 = sadd.s32 %s169, 1
      %p173 = scmp.eq.s32.totalorder %s16, 1
      %p174 = scmp.ne.s32.totalorder %s169, %s171
      %p175 = scmp.eq.s32.totalorder %s16, 0
      %p176 = por %p174, %p175
      %p177 = scmp.ne.s32.totalorder %s169, %s171
      %p178 = scmp.eq.s32.totalorder %s21, 1
      %p179 = por %p177, %p178
      %p180 = scmp.ne.s32.totalorder %s171, %s172
      %p181 = scmp.eq.s32.totalorder %s21, 0
      %p182 = por %p180, %p181
      %p183 = scmp.ne.s32.totalorder %s171, %s172
      %p184 = scmp.eq.s32.totalorder %s22, 1
      %p185 = por %p183, %p184
      %p187 = scmp.ne.s32.totalorder %s172, %s186
      %p188 = scmp.eq.s32.totalorder %s22, 0
      %p189 = por %p187, %p188
      %p190 = scmp.le.s32.totalorder 1, %s16
      %p191 = scmp.lt.s32.totalorder %s16, 3
      %p192 = pnand %p190, %p191
      %p193 = pneg %p192
      // Predicated region
      $region9: #{tpu_custom_call.1} parent=5 // pred_check
        _
      $region10: #{tpu_custom_call.1} parent=5 // pred_check_branch
        %195 = sbr.rel (%p192) target = $region12
      $region11: #{tpu_custom_call.1} parent=5 // pred_region
        %s196 = ssub.s32 %s16, 1
        // Predicated region
        $region13: #{tpu_custom_call.1} parent=11 // pred_check
          %p197 = pneg %p77
        $region14: #{tpu_custom_call.1} parent=11 // pred_check_branch
          %199 = sbr.rel (%p197) target = $region16
        $region15: #{tpu_custom_call.1} parent=11 // pred_region
          _
        $region16: #{tpu_custom_call.1} parent=11 // pred_fallthru
          _
        // Predicated region
        $region17: #{tpu_custom_call.1} parent=11 // pred_check
          %p200 = pneg %p98
        $region18: #{tpu_custom_call.1} parent=11 // pred_check_branch
          %202 = sbr.rel (%p200) target = $region20
        $region19: #{tpu_custom_call.1} parent=11 // pred_region
          _
        $region20: #{tpu_custom_call.1} parent=11 // pred_fallthru
          _
        // Predicated region
        $region21: #{tpu_custom_call.1} parent=11 // pred_check
          %p203 = pneg %p119
        $region22: #{tpu_custom_call.1} parent=11 // pred_check_branch
          %205 = sbr.rel (%p203) target = $region24
        $region23: #{tpu_custom_call.1} parent=11 // pred_region
          _
        $region24: #{tpu_custom_call.1} parent=11 // pred_fallthru
          _
        // Predicated region
        $region25: #{tpu_custom_call.1} parent=11 // pred_check
          %p206 = pneg %p140
        $region26: #{tpu_custom_call.1} parent=11 // pred_check_branch
          %208 = sbr.rel (%p206) target = $region28
        $region27: #{tpu_custom_call.1} parent=11 // pred_region
          _
        $region28: #{tpu_custom_call.1} parent=11 // pred_fallthru
          _
      $region12: #{tpu_custom_call.1} parent=5 // pred_fallthru
        _
      %p209 = scmp.lt.s32.totalorder %s16, 2
      // Predicated region
      $region29: #{tpu_custom_call.1} parent=5 // pred_check
        %p210 = pneg %p209
      $region30: #{tpu_custom_call.1} parent=5 // pred_check_branch
        %212 = sbr.rel (%p210) target = $region32
      $region31: #{tpu_custom_call.1} parent=5 // pred_region
        // Predicated region
        $region33: #{tpu_custom_call.1} parent=31 // pred_check
          %p213 = pneg %p50
        $region34: #{tpu_custom_call.1} parent=31 // pred_check_branch
          %215 = sbr.rel (%p213) target = $region36
        $region35: #{tpu_custom_call.1} parent=31 // pred_region
          %s216 = sand.u32 %s40, 1
          %s217 = scalar_lea.sflag [#allocation5], %s216
          %s218 = sand.u32 %s40, 1
          %s219 = smul.addr %s218, 8
          %s220 = scalar_lea.vmem [#allocation4], %s219
          %s221 = smul.u32 2, %s24
          %223 = vsyncadd %s217, 0
          %s224 = smul.addr %s23, 2
          %s225 = sadd.s32 %s221, %s224
          %s226 = smul.addr %s225, 4
          %s227 = scalar_lea.hbm %s0, %s226
          %s229 = sshll.u32 %s227, 4
          %s230 = int_to_ptr.hbm [resolvable:$true] %s229
          %s231 = sshll.u32 %s220, 4
          %s232 = int_to_ptr.vmem [resolvable:$true] %s231
          %234 = dma.hbm_to_vmem [thread:$0]  %s230, 128, %s232, %s217
        $region36: #{tpu_custom_call.1} parent=31 // pred_fallthru
          _
      $region32: #{tpu_custom_call.1} parent=5 // pred_fallthru
        _
      %p235 = scmp.le.s32.totalorder 1, %s16
      %p236 = scmp.lt.s32.totalorder %s16, 3
      %p237 = pnand %p235, %p236
      %p238 = pneg %p237
      // Predicated region
      $region37: #{tpu_custom_call.1} parent=5 // pred_check
        _
      $region38: #{tpu_custom_call.1} parent=5 // pred_check_branch
        %240 = sbr.rel (%p237) target = $region40
      $region39: #{tpu_custom_call.1} parent=5 // pred_region
        %s241 = ssub.s32 %s16, 1
        %s242 = sand.u32 %s43, 1
        %s243 = scalar_lea.sflag [#allocation5], %s242
        %s244 = sand.u32 %s43, 1
        %s245 = smul.addr %s244, 8
        %s246 = scalar_lea.vmem [#allocation4], %s245
        // Predicated region
        $region41: #{tpu_custom_call.1} parent=39 // pred_check
          %p247 = pneg %p56
        $region42: #{tpu_custom_call.1} parent=39 // pred_check_branch
          %249 = sbr.rel (%p247) target = $region44
        $region43: #{tpu_custom_call.1} parent=39 // pred_region
          %251 = dma.done %s243, 128
        $region44: #{tpu_custom_call.1} parent=39 // pred_fallthru
          _
        %s252 = sand.u32 %s43, 1
        %s253 = scalar_lea.sflag [#allocation5], %s252
        %s254 = sand.u32 %s43, 1
        %s255 = smul.addr %s254, 8
        %s256 = scalar_lea.vmem [#allocation4], %s255
        %p257 = pneg %p56
        %p258 = pneg %p53
        %p259 = pneg %p77
        %p260 = pneg %p74
        %p261 = pneg %p98
        %p262 = pneg %p95
        %p263 = pneg %p119
        %p264 = pneg %p116
        %p265 = pneg %p140
        %p266 = pneg %p137
        %p267 = pneg %p161
        %p268 = pneg %p158
        %p269 = pneg %p182
        %p270 = pneg %p179
        %s271 = smul.u32 2, %s26
        %p272 = scmp.eq.s32.totalorder %s25, 0
        %p273 = scmp.eq.s32.totalorder %s26, 0
        %p274 = pnand %p272, %p273
        %p275 = pneg %p274
        // Predicated region
        $region45: #{tpu_custom_call.1} parent=39 // pred_check
          _
        $region46: #{tpu_custom_call.1} parent=39 // pred_check_branch
          %277 = sbr.rel (%p274) target = $region48
        $region47: #{tpu_custom_call.1} parent=39 // pred_region
          %vm278 = vcmask 3072
          %279 = vst.msk [vmem:[#allocation2] sm:$0xf] %vm278, 0.0
          %280 = vst.msk [vmem:[#allocation3] sm:$0xf] %vm278, 0.0
        $region48: #{tpu_custom_call.1} parent=39 // pred_fallthru
          _
        %v281 = vld [vmem:[%s1] sm:$0xf]
        %v282 = vld [vmem:[%s2] sm:$0xf]
        %v283 = vld [vmem:[%s246] sm:$0xff]
        %285 = vset.pattern.permute.xlu0 0
        %286 = vperm.xlu0 %285, %v281
        %v287 = vpop.permute.xlu0 %286
        %v290 = vperm.slane %v283, 0
        %v291 = vperm.slane %v283, 4
        %v294 = vperm.slane %v290, 0
        %v295 = vperm.slane %v291, 0
        %v296 = vmul.f32 %v287, %v294
        %v297 = vmul.f32 %v287, %v295
        %298 = vset.pattern.permute.xlu0 1
        %299 = vperm.xlu0 %298, %v281
        %v300 = vpop.permute.xlu0 %299
        %v302 = vperm.slane %v283, 1
        %v303 = vperm.slane %v283, 5
        %v306 = vperm.slane %v302, 1
        %v307 = vperm.slane %v303, 1
        %v308 = vmul.f32 %v300, %v306
        %v309 = vmul.f32 %v300, %v307
        %v310 = vadd.f32 %v296, %v308
        %v311 = vadd.f32 %v297, %v309
        %312 = vset.pattern.permute.xlu0 2
        %313 = vperm.xlu0 %312, %v281
        %v314 = vpop.permute.xlu0 %313
        %v316 = vperm.slane %v283, 2
        %v317 = vperm.slane %v283, 6
        %v320 = vperm.slane %v316, 2
        %v321 = vperm.slane %v317, 2
        %v322 = vmul.f32 %v314, %v320
        %v323 = vmul.f32 %v314, %v321
        %v324 = vadd.f32 %v310, %v322
        %v325 = vadd.f32 %v311, %v323
        %326 = vset.pattern.permute.xlu0 3
        %327 = vperm.xlu0 %326, %v281
        %v328 = vpop.permute.xlu0 %327
        %v330 = vperm.slane %v283, 3
        %v331 = vperm.slane %v283, 7
        %v334 = vperm.slane %v330, 3
        %v335 = vperm.slane %v331, 3
        %v336 = vmul.f32 %v328, %v334
        %v337 = vmul.f32 %v328, %v335
        %v338 = vadd.f32 %v324, %v336
        %v339 = vadd.f32 %v325, %v337
        %341 = vset.pattern.permute.xlu0 0
        %342 = vperm.xlu0 %341, %v282
        %v343 = vpop.permute.xlu0 %342
        %v345 = vadd.f32 %v338, %v343
        %v346 = vadd.f32 %v339, %v343
        %v347 = vld [vmem:[#allocation2] sm:$0xf]
        %vm348 = vcmask 1043456
        %v349 = vsel %vm348, %v345, 0.0
        %v350 = vsel %vm348, %v346, 0.0
        %v351 = vadd.f32 %v349, %v350
        %352 = vadd.xlane.f32.xlu0 %v351
        %v353 = vpop.xlane.xlu0 %352
        %v354 = vadd.f32 %v347, %v353
        %vm355 = vcmask 3072
        %356 = vst.msk [vmem:[#allocation2] sm:$0xf] %vm355, %v354
        %v357 = vld [vmem:[#allocation3] sm:$0xf]
        %v358 = vmul.f32 %v345, %v345
        %v359 = vmul.f32 %v346, %v346
        %v360 = vsel %vm348, %v358, 0.0
        %v361 = vsel %vm348, %v359, 0.0
        %v362 = vadd.f32 %v360, %v361
        %363 = vadd.xlane.f32.xlu0 %v362
        %v364 = vpop.xlane.xlu0 %363
        %v365 = vadd.f32 %v357, %v364
        %366 = vst.msk [vmem:[#allocation3] sm:$0xf] %vm355, %v365
        %p367 = scmp.eq.s32.totalorder %s25, 1
        %p368 = pnand %p367, %p273
        %p369 = pneg %p368
        // Predicated region
        $region49: #{tpu_custom_call.1} parent=39 // pred_check
          _
        $region50: #{tpu_custom_call.1} parent=39 // pred_check_branch
          %371 = sbr.rel (%p368) target = $region52
        $region51: #{tpu_custom_call.1} parent=39 // pred_region
          %v372 = vld [vmem:[#allocation2] sm:$0xf]
          %v373 = vmul.f32 %v372, 0.001953125
          %v374 = vld [vmem:[#allocation3] sm:$0xf]
          %v375 = vmul.f32 %v374, 0.001953125
          %v376 = vmul.f32 %v373, %v373
          %v377 = vsub.f32 %v375, %v376
          %v378 = vmax.f32 %v377, 0.0
          %v379 = vadd.f32 %v378, 1e-05
          %v380 = vrsqrt.pop %v379
          %v381 = vmul.f32 %v380, %v379
          %v382 = vmul.f32 %v381, %v380
          %v383 = vmul.f32 0.5, %v382
          %v384 = vsub.f32 1.5, %v383
          %v385 = vmul.f32 %v380, %v384
          %vm386 = vweird.f32 %v379
          %vm387 = vweird.f32 %v380
          %vm388 = vmor %vm386, %vm387
          %v389 = vsel %vm388, %v380, %v385
          %v390 = vld [vmem:[%s3] sm:$0xf]
          %v391 = vmul.f32 %v390, %v389
          %392 = vst.msk [vmem:[%s5] sm:$0xf] %vm355, %v391
          %v393 = vld [vmem:[%s4] sm:$0xf]
          %v394 = vmul.f32 %v373, %v391
          %v395 = vsub.f32 %v393, %v394
          %396 = vst.msk [vmem:[%s6] sm:$0xf] %vm355, %v395
        $region52: #{tpu_custom_call.1} parent=39 // pred_fallthru
          _
        // Predicated region
        $region53: #{tpu_custom_call.1} parent=39 // pred_check
          %p397 = pneg %p158
        $region54: #{tpu_custom_call.1} parent=39 // pred_check_branch
          %399 = sbr.rel (%p397) target = $region56
        $region55: #{tpu_custom_call.1} parent=39 // pred_region
          _
        $region56: #{tpu_custom_call.1} parent=39 // pred_fallthru
          _
        // Predicated region
        $region57: #{tpu_custom_call.1} parent=39 // pred_check
          %p400 = pneg %p179
        $region58: #{tpu_custom_call.1} parent=39 // pred_check_branch
          %402 = sbr.rel (%p400) target = $region60
        $region59: #{tpu_custom_call.1} parent=39 // pred_region
          _
        $region60: #{tpu_custom_call.1} parent=39 // pred_fallthru
          _
        // Predicated region
        $region61: #{tpu_custom_call.1} parent=39 // pred_check
          %p403 = pneg %p158
        $region62: #{tpu_custom_call.1} parent=39 // pred_check_branch
          %405 = sbr.rel (%p403) target = $region64
        $region63: #{tpu_custom_call.1} parent=39 // pred_region
          _
        $region64: #{tpu_custom_call.1} parent=39 // pred_fallthru
          _
        // Predicated region
        $region65: #{tpu_custom_call.1} parent=39 // pred_check
          %p406 = pneg %p179
        $region66: #{tpu_custom_call.1} parent=39 // pred_check_branch
          %408 = sbr.rel (%p406) target = $region68
        $region67: #{tpu_custom_call.1} parent=39 // pred_region
          _
        $region68: #{tpu_custom_call.1} parent=39 // pred_fallthru
          _
      $region40: #{tpu_custom_call.1} parent=5 // pred_fallthru
        _
      %p409 = scmp.le.s32.totalorder 2, %s16
      // Predicated region
      $region69: #{tpu_custom_call.1} parent=5 // pred_check
        %p410 = pneg %p409
      $region70: #{tpu_custom_call.1} parent=5 // pred_check_branch
        %412 = sbr.rel (%p410) target = $region72
      $region71: #{tpu_custom_call.1} parent=5 // pred_region
        %s413 = ssub.s32 %s16, 2
      $region72: #{tpu_custom_call.1} parent=5 // pred_fallthru
        _
    $region6: #{tpu_custom_call.1} parent=1 // loop_footer
      %s20 = sadd.s32 1, %s16
    $region7: #{tpu_custom_call.1} parent=1 // loop_footer_branch
      %15 = sbr.rel target = $region3
    $region8: #{tpu_custom_call.1} parent=1 // loop_exit
      _
    %414 = vsyncpa [#allocation5], 1
    %s415 = scalar_lea.sflag [#allocation5], 1
    %416 = vsyncpa %s415, 1

</llo_original>
